<compile_context>
chip_gen: v5e
topology: v5e:2x2
jax: 0.10.0
libtpu: 0.0.40
codegen_flags: <defaults>
</compile_context>

<pallas_src>
import functools

import numpy as np

import jax
import jax.numpy as jnp
from jax.experimental import pallas as pl
from jax.experimental.pallas import tpu as pltpu


def _freq_band_attn_kernel(x_ref, wt_ref, b_ref, e_ref, o_ref):
    x = x_ref[...]                                        # [TB, F], native dtype
    # logits = x @ W.T + b  -> [TB, num_bands] (f32 accumulation on the MXU)
    logits = jnp.dot(x, wt_ref[...],
                     preferred_element_type=jnp.float32) + b_ref[...]

    # softmax over bands (dim=1 in the PyTorch module), max-stabilized
    m = jnp.max(logits, axis=-1, keepdims=True)
    p = jnp.exp(logits - m)
    denom = jnp.sum(p, axis=-1, keepdims=True)
    weights = p * pl.reciprocal(denom, approx=True)       # [TB, num_bands], f32

    # expand band weights to a per-feature scale with one MXU matmul
    w_full = jnp.dot(weights, e_ref[...],
                     preferred_element_type=jnp.float32)  # [TB, F], f32

    if x.dtype == jnp.float32:
        o_ref[...] = (x * w_full).astype(o_ref.dtype)
    else:
        # keep the elementwise multiply in the narrow dtype (v6e/v7x bf16 VALU);
        # weights are in [0, 1] so precision impact is negligible.
        o_ref[...] = (x * w_full.astype(x.dtype)).astype(o_ref.dtype)


def _round_up(x, m):
    return ((x + m - 1) // m) * m


@functools.lru_cache(maxsize=None)
def _expansion_matrix_np(num_bands, band_features):
    """E[i, i*bf:(i+1)*bf] = 1 (built once, cached as NumPy, device-agnostic)."""
    f = num_bands * band_features
    band_of_feat = np.arange(f) // band_features          # [F]
    e = (band_of_feat[None, :] == np.arange(num_bands)[:, None])
    return e.astype(np.float32)                            # [num_bands, F]


# Target rows per grid step; ~1.25 MiB f32 per buffer at F=160.
_TARGET_TILE_B = 2048


def frequency_band_attention(x, w, b, num_bands=5, band_features=32):
    """x: [B, F]; w: [num_bands, F] (PyTorch Linear weight layout); b: [num_bands]."""
    total_features = num_bands * band_features
    if x.shape[1] != total_features:
        return x  # matches the PyTorch early-return

    B, F = x.shape
    dtype = x.dtype

    wt = jnp.transpose(w).astype(jnp.float32)              # [F, num_bands]
    b2 = b.reshape(1, num_bands).astype(jnp.float32)       # [1, num_bands]
    e = jnp.asarray(_expansion_matrix_np(num_bands, band_features))  # [nb, F]

    # --- batch tiling ---------------------------------------------------
    # num_tiles chosen so padding waste is bounded by 8*num_tiles rows, and
    # (when B allows) there are >= 2 steps so the "parallel" grid axis shards
    # across both v7x TensorCores.
    num_tiles = pl.cdiv(B, _TARGET_TILE_B)
    if num_tiles < 2 and B >= 16:
        num_tiles = 2
    tile_b = _round_up(pl.cdiv(B, num_tiles), 8)
    b_pad = tile_b * num_tiles

    if b_pad != B:
        x_in = jnp.pad(x, ((0, b_pad - B), (0, 0)))
    else:
        x_in = x
    grid = (num_tiles,)

    itemsize = jnp.dtype(dtype).itemsize
    cost = pl.CostEstimate(
        flops=4 * b_pad * F * num_bands + 2 * b_pad * F,
        transcendentals=b_pad * num_bands,
        bytes_accessed=2 * b_pad * F * itemsize,
    )

    out = pl.pallas_call(
        _freq_band_attn_kernel,
        out_shape=jax.ShapeDtypeStruct((b_pad, F), dtype),
        grid_spec=pl.GridSpec(
            grid=grid,
            in_specs=[
                pl.BlockSpec((tile_b, F), lambda i: (i, 0)),       # x tile (streamed)
                pl.BlockSpec((F, num_bands), lambda i: (0, 0)),    # Wt (VMEM-resident)
                pl.BlockSpec((1, num_bands), lambda i: (0, 0)),    # bias (resident)
                pl.BlockSpec((num_bands, F), lambda i: (0, 0)),    # E (resident)
            ],
            out_specs=pl.BlockSpec((tile_b, F), lambda i: (i, 0)),
        ),
        compiler_params=pltpu.CompilerParams(
            dimension_semantics=("parallel",)),
        cost_estimate=cost,
    )(x_in, wt, b2, e)

    if b_pad != B:
        out = out[:B]
    return out


if __name__ == "__main__":
    num_bands = 5
    band_features = 32
    total_features = num_bands * band_features
    B = 8

    key = jax.random.PRNGKey(0)
    kx, kw, kb = jax.random.split(key, 3)

    x = jax.random.normal(kx, (B, total_features), dtype=jnp.float32)
    # deterministic "PyTorch-like" init: uniform(-1/sqrt(fan_in), 1/sqrt(fan_in))
    bound = 1.0 / (total_features ** 0.5)
    w = jax.random.uniform(kw, (num_bands, total_features),
                           minval=-bound, maxval=bound, dtype=jnp.float32)
    b = jax.random.uniform(kb, (num_bands,),
                           minval=-bound, maxval=bound, dtype=jnp.float32)

    out = frequency_band_attention(x, w, b, num_bands, band_features)
    out = jax.block_until_ready(out)

    # pure-JAX reference check (tolerance accounts for approx reciprocal)
    logits = x @ w.T + b
    weights = jax.nn.softmax(logits, axis=1)
    ref = (x.reshape(B, num_bands, band_features) * weights[:, :, None]).reshape(B, -1)
    assert out.shape == ref.shape, "shape mismatch vs reference"
    assert jnp.allclose(out, ref, atol=2e-3, rtol=2e-3), "mismatch vs reference"

    print("KERNEL_OK")
</pallas_src>

<mosaic_0001>
module attributes {stable_mosaic.version = 11 : i64} {
  func.func @_freq_band_attn_kernel(%arg0: i32, %arg1: memref<8x160xf32, #tpu.memory_space<vmem>>, %arg2: memref<160x5xf32, #tpu.memory_space<vmem>>, %arg3: memref<1x5xf32, #tpu.memory_space<vmem>>, %arg4: memref<5x160xf32, #tpu.memory_space<vmem>>, %arg5: memref<8x160xf32, #tpu.memory_space<vmem>>) attributes {dimension_semantics = [#tpu.dimension_semantics<parallel>], iteration_bounds = array<i64: 1>, scalar_prefetch = 0 : i64, scratch_operands = 0 : i64, tpu.core_type = #tpu.core_type<tc>, window_params = [{transform_indices = @transform_0, window_bounds = array<i64: 8, 160>}, {pipeline_mode = #tpu.pipeline_mode<synchronous>, transform_indices = @transform_1, window_bounds = array<i64: 160, 5>}, {pipeline_mode = #tpu.pipeline_mode<synchronous>, transform_indices = @transform_2, window_bounds = array<i64: 1, 5>}, {pipeline_mode = #tpu.pipeline_mode<synchronous>, transform_indices = @transform_3, window_bounds = array<i64: 5, 160>}, {transform_indices = @transform_4, window_bounds = array<i64: 8, 160>}]} {
    %c0 = arith.constant 0 : index
    %c0_0 = arith.constant 0 : index
    %0 = vector.load %arg1[%c0, %c0_0] : memref<8x160xf32, #tpu.memory_space<vmem>>, vector<8x160xf32>
    %c0_1 = arith.constant 0 : index
    %c0_2 = arith.constant 0 : index
    %1 = vector.load %arg2[%c0_1, %c0_2] : memref<160x5xf32, #tpu.memory_space<vmem>>, vector<160x5xf32>
    %cst = arith.constant dense<0.000000e+00> : vector<8x5xf32>
    %2 = tpu.matmul %0, %1, %cst {dimension_numbers = #tpu.dot_dimension_numbers<[1], [0], [0], [1], [0, 0, 1, 1], [], []>} : vector<8x160xf32>, vector<160x5xf32>, vector<8x5xf32> -> vector<8x5xf32>
    %c0_3 = arith.constant 0 : index
    %c0_4 = arith.constant 0 : index
    %3 = vector.load %arg3[%c0_3, %c0_4] : memref<1x5xf32, #tpu.memory_space<vmem>>, vector<1x5xf32>
    %4 = vector.broadcast %3 : vector<1x5xf32> to vector<8x5xf32>
    %5 = arith.addf %2, %4 : vector<8x5xf32>
    %cst_5 = arith.constant dense<0xFF800000> : vector<8xf32>
    %6 = vector.multi_reduction <maximumf>, %5, %cst_5 [1] : vector<8x5xf32> to vector<8xf32>
    %7 = vector.shape_cast %6 : vector<8xf32> to vector<8x1xf32>
    %8 = vector.broadcast %7 : vector<8x1xf32> to vector<8x5xf32>
    %9 = arith.subf %5, %8 : vector<8x5xf32>
    %10 = math.exp %9 : vector<8x5xf32>
    %cst_6 = arith.constant dense<0.000000e+00> : vector<8xf32>
    %11 = vector.multi_reduction <add>, %10, %cst_6 [1] : vector<8x5xf32> to vector<8xf32>
    %12 = vector.shape_cast %11 : vector<8xf32> to vector<8x1xf32>
    %13 = tpu.reciprocal %12 {approx = true} : vector<8x1xf32> -> vector<8x1xf32>
    %14 = vector.broadcast %13 : vector<8x1xf32> to vector<8x5xf32>
    %15 = arith.mulf %10, %14 : vector<8x5xf32>
    %c0_7 = arith.constant 0 : index
    %c0_8 = arith.constant 0 : index
    %16 = vector.load %arg4[%c0_7, %c0_8] : memref<5x160xf32, #tpu.memory_space<vmem>>, vector<5x160xf32>
    %cst_9 = arith.constant dense<0.000000e+00> : vector<8x160xf32>
    %17 = tpu.matmul %15, %16, %cst_9 {dimension_numbers = #tpu.dot_dimension_numbers<[1], [0], [0], [1], [0, 0, 1, 1], [], []>} : vector<8x5xf32>, vector<5x160xf32>, vector<8x160xf32> -> vector<8x160xf32>
    %18 = arith.mulf %0, %17 : vector<8x160xf32>
    %c0_10 = arith.constant 0 : index
    %c0_11 = arith.constant 0 : index
    %19 = vector.load %arg5[%c0_10, %c0_11] : memref<8x160xf32, #tpu.memory_space<vmem>>, vector<8x160xf32>
    tpu.vector_store %arg5[%c0_10, %c0_11], %18 {strides = array<i32>} : memref<8x160xf32, #tpu.memory_space<vmem>>, vector<8x160xf32>,
    return
  }
  func.func @transform_0(%arg0: i32) -> (i32, i32) {
    %c0_i32 = arith.constant 0 : i32
    %c0_i32_0 = arith.constant 0 : i32
    return %arg0, %c0_i32 : i32, i32
  }
  func.func @transform_1(%arg0: i32) -> (i32, i32) {
    %c0_i32 = arith.constant 0 : i32
    %c0_i32_0 = arith.constant 0 : i32
    %c0_i32_1 = arith.constant 0 : i32
    return %c0_i32, %c0_i32_0 : i32, i32
  }
  func.func @transform_2(%arg0: i32) -> (i32, i32) {
    %c0_i32 = arith.constant 0 : i32
    %c0_i32_0 = arith.constant 0 : i32
    %c0_i32_1 = arith.constant 0 : i32
    return %c0_i32, %c0_i32_0 : i32, i32
  }
  func.func @transform_3(%arg0: i32) -> (i32, i32) {
    %c0_i32 = arith.constant 0 : i32
    %c0_i32_0 = arith.constant 0 : i32
    %c0_i32_1 = arith.constant 0 : i32
    return %c0_i32, %c0_i32_0 : i32, i32
  }
  func.func @transform_4(%arg0: i32) -> (i32, i32) {
    %c0_i32 = arith.constant 0 : i32
    %c0_i32_0 = arith.constant 0 : i32
    return %arg0, %c0_i32 : i32, i32
  }
}

</mosaic_0001>

<llo_original>
// kernel: tpu_custom_call.1
$region0: #{tpu_custom_call.1}
  #allocation0 [shape = 'u32[]', space=smem, size = 0x4, offset = 0x4, fixed_abs, tag = 'smem constant byte address 0x4 - core index']
  #allocation1 [shape = 'u32[72,128]{1,0:T(1,128)}', space=vmem, size = 0x9000, scoped, tag = 'internal scratch']
  %s0 = inlined_call_operand.vmem [shape: f32[8,160], index: 0, kind: input, shape index: {}]
  %s1 = inlined_call_operand.vmem [shape: f32[160,5], index: 1, kind: input, shape index: {}]
  %s2 = inlined_call_operand.vmem [shape: f32[1,5], index: 2, kind: input, shape index: {}]
  %s3 = inlined_call_operand.vmem [shape: f32[5,160], index: 3, kind: input, shape index: {}]
  %s4 = inlined_call_operand.hbm [shape: f32[8,160], index: 4, kind: output, shape index: {}]
  %s5 = sld [smem:[#allocation0]]
  $region26: #{tpu_custom_call.1} parent=0
    _
  %s7 = ssub.s32 1, %s5
  %s8 = scalar_select 0, %s7, %s5
  $region1: #{tpu_custom_call.1} parent=0
    #allocation2 [shape = 'u8[8192]{0}', space=vmem, size = 0x2000, scoped, tag = 'output window, operand 0, single buffered']
    #allocation3 [shape = 's32[1]{0}', space=sflag, size = 0x4, scoped, tag = 'scoped memory for tpu_custom_call.1']
    %9 = vsyncpa [#allocation3], 0
    // Predicated region
    $region2: #{tpu_custom_call.1} parent=1 // pred_check
      _
    $region3: #{tpu_custom_call.1} parent=1 // pred_check_branch
      %11 = sbr.rel (0) target = $region5
    $region4: #{tpu_custom_call.1} parent=1 // pred_region
      _
    $region5: #{tpu_custom_call.1} parent=1 // pred_fallthru
      _
    // Predicated region
    $region6: #{tpu_custom_call.1} parent=1 // pred_check
      _
    $region7: #{tpu_custom_call.1} parent=1 // pred_check_branch
      %13 = sbr.rel (0) target = $region9
    $region8: #{tpu_custom_call.1} parent=1 // pred_region
      _
    $region9: #{tpu_custom_call.1} parent=1 // pred_fallthru
      _
    // Predicated region
    $region10: #{tpu_custom_call.1} parent=1 // pred_check
      _
    $region11: #{tpu_custom_call.1} parent=1 // pred_check_branch
      %15 = sbr.rel (0) target = $region13
    $region12: #{tpu_custom_call.1} parent=1 // pred_region
      _
    $region13: #{tpu_custom_call.1} parent=1 // pred_fallthru
      _
    // Predicated region
    $region14: #{tpu_custom_call.1} parent=1 // pred_check
      _
    $region15: #{tpu_custom_call.1} parent=1 // pred_check_branch
      %17 = sbr.rel (0) target = $region17
    $region16: #{tpu_custom_call.1} parent=1 // pred_region
      _
    $region17: #{tpu_custom_call.1} parent=1 // pred_fallthru
      _
    %v18 = vld [vmem:[%s0] sm:$0xff]
    %v19 = vld [vmem:[%s0 + $0x8] sm:$0xff]
    %v20 = vld [vmem:[%s1] sm:$0xff]
    %v21 = vld [vmem:[%s1 + $0x8] sm:$0xff]
    %v22 = vld [vmem:[%s1 + $0x10] sm:$0xff]
    %v23 = vld [vmem:[%s1 + $0x18] sm:$0xff]
    %v24 = vld [vmem:[%s1 + $0x20] sm:$0xff]
    %v25 = vld [vmem:[%s1 + $0x28] sm:$0xff]
    %v26 = vld [vmem:[%s1 + $0x30] sm:$0xff]
    %v27 = vld [vmem:[%s1 + $0x38] sm:$0xff]
    %v28 = vld [vmem:[%s1 + $0x40] sm:$0xff]
    %v29 = vld [vmem:[%s1 + $0x48] sm:$0xff]
    %v30 = vld [vmem:[%s1 + $0x50] sm:$0xff]
    %v31 = vld [vmem:[%s1 + $0x58] sm:$0xff]
    %v32 = vld [vmem:[%s1 + $0x60] sm:$0xff]
    %v33 = vld [vmem:[%s1 + $0x68] sm:$0xff]
    %v34 = vld [vmem:[%s1 + $0x70] sm:$0xff]
    %v35 = vld [vmem:[%s1 + $0x78] sm:$0xff]
    %v36 = vld [vmem:[%s1 + $0x80] sm:$0xff]
    %v37 = vld [vmem:[%s1 + $0x88] sm:$0xff]
    %v38 = vld [vmem:[%s1 + $0x90] sm:$0xff]
    %v39 = vld [vmem:[%s1 + $0x98] sm:$0xff]
    %v40 = vld [vmem:[%s2] sm:$0x1]
    %v42 = vperm.slane %v40, 0
    %vm44 = vcmask 261120
    %v46 = vsel %vm44, %v19, 0
    %48 = vmatpush.msra.mxu0 %v35
    %49 = vmatpush.msra.mxu0 %v34
    %50 = vmatpush.msra.mxu0 %v33
    %51 = vmatpush.msra.mxu0 %v32
    %52 = vmatpush.msra.mxu0 %v31
    %53 = vmatpush.msra.mxu0 %v30
    %54 = vmatpush.msra.mxu0 %v29
    %55 = vmatpush.msra.mxu0 %v28
    %56 = vmatpush.msra.mxu0 %v27
    %57 = vmatpush.msra.mxu0 %v26
    %58 = vmatpush.msra.mxu0 %v25
    %59 = vmatpush.msra.mxu0 %v24
    %60 = vmatpush.msra.mxu0 %v23
    %61 = vmatpush.msra.mxu0 %v22
    %62 = vmatpush.msra.mxu0 %v21
    %63 = vmatpush.msra.mxu0 %v20
    %64 = vmatmul.f32.gmra.mxu0 %v18
    %v65 = vpop.f32.mrf.mxu0
    %v66 = vadd.f32 %v42, %v65
    %67 = vdwg.mxu0
    %68 = vmatpush.msra.mxu0 0.0
    %69 = vmatpush.msra.mxu0 0.0
    %70 = vmatpush.msra.mxu0 0.0
    %71 = vmatpush.msra.mxu0 0.0
    %72 = vmatpush.msra.mxu0 0.0
    %73 = vmatpush.msra.mxu0 0.0
    %74 = vmatpush.msra.mxu0 0.0
    %75 = vmatpush.msra.mxu0 0.0
    %76 = vmatpush.msra.mxu0 0.0
    %77 = vmatpush.msra.mxu0 0.0
    %78 = vmatpush.msra.mxu0 0.0
    %79 = vmatpush.msra.mxu0 0.0
    %80 = vmatpush.msra.mxu0 %v39
    %81 = vmatpush.msra.mxu0 %v38
    %82 = vmatpush.msra.mxu0 %v37
    %83 = vmatpush.msra.mxu0 %v36
    %84 = vmatmul.f32.gmra.mxu0 %v46
    %v85 = vpop.f32.mrf.mxu0
    %v86 = vadd.f32 %v66, %v85
    %87 = vdwg.mxu0
    %vm88 = vcmask 39936
    %v89 = vsel %vm88, %v86, -inf
    %90 = vmax.xlane.f32.xlu0 %v89
    %v91 = vpop.xlane.xlu0 %90
    %v92 = vsub.f32 %v86, %v91
    %v93 = vmul.f32 %v92, 1.442695
    %v94 = vpow.pop %v93
    %v95 = vsel %vm88, %v94, 0.0
    %96 = vadd.xlane.f32.xlu0 %v95
    %v97 = vpop.xlane.xlu0 %96
    %v98 = vrcp.pop %v97
    %v99 = vmul.f32 %v94, %v98
    %v100 = vld [vmem:[%s3] sm:$0x1f]
    %v101 = vld [vmem:[%s3 + $0x8] sm:$0x1f]
    %v103 = vsel %vm88, %v99, 0
    %vm105 = vcmask 1044480
    %v107 = vsel %vm105, %v100, 0
    %v110 = vsel %vm105, %v101, 0
    %112 = vmatpush.msra.mxu0 0.0
    %113 = vmatpush.msra.mxu0 0.0
    %114 = vmatpush.msra.mxu0 0.0
    %115 = vmatpush.msra.mxu0 0.0
    %116 = vmatpush.msra.mxu0 0.0
    %117 = vmatpush.msra.mxu0 0.0
    %118 = vmatpush.msra.mxu0 0.0
    %119 = vmatpush.msra.mxu0 0.0
    %120 = vmatpush.msra.mxu0 0.0
    %121 = vmatpush.msra.mxu0 0.0
    %122 = vmatpush.msra.mxu0 0.0
    %123 = vmatpush.msra.mxu0 0.0
    %124 = vmatpush.msra.mxu0 0.0
    %125 = vmatpush.msra.mxu0 0.0
    %126 = vmatpush.msra.mxu0 0.0
    %127 = vmatpush.msra.mxu0 %v107
    %128 = vmatmul.f32.gmra.mxu0 %v103
    %v129 = vpop.f32.mrf.mxu0
    %v130 = vadd.f32 0.0, %v129
    %131 = vdwg.mxu0
    %132 = vmatpush.msra.mxu0 0.0
    %133 = vmatpush.msra.mxu0 0.0
    %134 = vmatpush.msra.mxu0 0.0
    %135 = vmatpush.msra.mxu0 0.0
    %136 = vmatpush.msra.mxu0 0.0
    %137 = vmatpush.msra.mxu0 0.0
    %138 = vmatpush.msra.mxu0 0.0
    %139 = vmatpush.msra.mxu0 0.0
    %140 = vmatpush.msra.mxu0 0.0
    %141 = vmatpush.msra.mxu0 0.0
    %142 = vmatpush.msra.mxu0 0.0
    %143 = vmatpush.msra.mxu0 0.0
    %144 = vmatpush.msra.mxu0 0.0
    %145 = vmatpush.msra.mxu0 0.0
    %146 = vmatpush.msra.mxu0 0.0
    %147 = vmatpush.msra.mxu0 %v110
    %148 = vmatmul.f32.gmra.mxu0 %v103
    %v149 = vpop.f32.mrf.mxu0
    %v150 = vadd.f32 0.0, %v149
    %151 = vdwg.mxu0
    %v152 = vmul.f32 %v18, %v130
    %v153 = vmul.f32 %v19, %v150
    %154 = vst [vmem:[#allocation2] sm:$0xff] %v152
    %155 = vst.msk [vmem:[#allocation2 + $0x8] sm:$0xff] %vm44, %v153
    // Predicated region
    $region18: #{tpu_custom_call.1} parent=1 // pred_check
      _
    $region19: #{tpu_custom_call.1} parent=1 // pred_check_branch
      %157 = sbr.rel (0) target = $region21
    $region20: #{tpu_custom_call.1} parent=1 // pred_region
      %159 = vsyncadd [#allocation3], 0
      %s161 = sshll.u32 [#allocation2], 4
      %s162 = int_to_ptr.vmem [resolvable:$true] %s161
      %s163 = sshll.u32 %s4, 4
      %s164 = int_to_ptr.hbm [resolvable:$true] %s163
      %166 = dma.vmem_to_hbm [thread:$0]  %s162, 256, %s164, [#allocation3]
    $region21: #{tpu_custom_call.1} parent=1 // pred_fallthru
      _
    // Predicated region
    $region22: #{tpu_custom_call.1} parent=1 // pred_check
      _
    $region23: #{tpu_custom_call.1} parent=1 // pred_check_branch
      %168 = sbr.rel (0) target = $region25
    $region24: #{tpu_custom_call.1} parent=1 // pred_region
      %170 = dma.done [#allocation3], 256
    $region25: #{tpu_custom_call.1} parent=1 // pred_fallthru
      _
    %171 = vsyncpa [#allocation3], 1

</llo_original>
